<compile_context>
chip_gen: v7x
topology: tpu7x:2x2x1
jax: 0.10.0
libtpu: 0.0.40
codegen_flags: <defaults>
</compile_context>

<pallas_src>
import functools

import numpy as np
import jax
import jax.numpy as jnp
from jax import lax
from jax.experimental import pallas as pl
from jax.experimental.pallas import tpu as pltpu

_SCALE = 10.0 / float(np.log(10.0))   # matches numpy.log(10) in the PyTorch module
_EPS = 1e-8
_Y_COEF = (65.481, 128.553, 24.966)
_Y_COEF_255 = tuple(c / 255.0 for c in _Y_COEF)   # /255 folded into the mix coefficients
_DEFAULT_BLOCK_BYTES = 4 << 20        # ~4 MiB per input block
_VMEM_LIMIT_BYTES = 32 << 20          # 2 inputs x 2 buffers x 4 MiB + scratch, with margin


def _round_up(x, m):
    return (x + m - 1) // m * m


def _accumulate(dd, acc_ref, *, tile_rows):
    """Accumulate the per-chunk squared diffs into the small (8,128) scratch."""
    if tile_rows % 8 == 0:
        # Layout-trivial regroup of sublanes; cross-vreg VALU adds only.
        acc_ref[...] += dd.reshape(tile_rows // 8, 8, 128).sum(axis=0)
    else:
        # Only hit in the single-chunk small-input case (tile_rows == rows < multiple of 8).
        acc_ref[0:1, :] += jnp.sum(dd, axis=0, keepdims=True)


def _sse_kernel(pred_ref, target_ref, out_ref, acc_ref, *,
                valid_rows, tile_rows, mask_rows):
    """Per-sample sum of squared diffs over a lane-dense (tile_rows, 128) chunk."""
    c = pl.program_id(1)

    @pl.when(c == 0)
    def _():
        acc_ref[...] = jnp.zeros_like(acc_ref)

    d = pred_ref[0, 0].astype(jnp.float32) - target_ref[0, 0].astype(jnp.float32)
    dd = d * d
    if mask_rows:
        row = c * tile_rows + lax.broadcasted_iota(jnp.int32, dd.shape, 0)
        dd = jnp.where(row < valid_rows, dd, 0.0)
    _accumulate(dd, acc_ref, tile_rows=tile_rows)

    @pl.when(c == pl.num_programs(1) - 1)
    def _():
        out_ref[0] = acc_ref[...]


def _sse_toy_kernel(pred_ref, target_ref, out_ref, acc_ref, *,
                    valid_rows, tile_rows, mask_rows):
    """toY fused: (coef.p+16)/255 - (coef.t+16)/255 = sum_c (coef_c/255)*(p_c - t_c)."""
    c = pl.program_id(1)

    @pl.when(c == 0)
    def _():
        acc_ref[...] = jnp.zeros_like(acc_ref)

    c0, c1, c2 = _Y_COEF_255
    yd = (c0 * (pred_ref[0, 0].astype(jnp.float32) - target_ref[0, 0].astype(jnp.float32))
          + c1 * (pred_ref[0, 1].astype(jnp.float32) - target_ref[0, 1].astype(jnp.float32))
          + c2 * (pred_ref[0, 2].astype(jnp.float32) - target_ref[0, 2].astype(jnp.float32)))
    dd = yd * yd
    if mask_rows:
        row = c * tile_rows + lax.broadcasted_iota(jnp.int32, dd.shape, 0)
        dd = jnp.where(row < valid_rows, dd, 0.0)
    _accumulate(dd, acc_ref, tile_rows=tile_rows)

    @pl.when(c == pl.num_programs(1) - 1)
    def _():
        out_ref[0] = acc_ref[...]


def psnr_loss(pred, target, *, loss_weight=1.0, toY=False,
              block_bytes=_DEFAULT_BLOCK_BYTES):
    """PSNRLoss.forward.  pred/target: (N, C, H, W)."""
    assert pred.ndim == 4 and target.shape == pred.shape
    N, C, H, W = pred.shape
    itemsize = np.dtype(pred.dtype).itemsize

    if toY:
        assert C == 3, "toY requires 3-channel input"
        chans = 3
        per_chan = H * W          # Y has a single channel
        count = H * W
    else:
        chans = 1
        per_chan = C * H * W
        count = C * H * W

    # Free reshapes into a (N, chans, per_chan) flat view.
    pred_f = pred.reshape(N, chans, per_chan)
    target_f = target.reshape(N, chans, per_chan)

    lane_len = _round_up(per_chan, 128)
    rows = lane_len // 128
    pad = lane_len - per_chan
    if pad:
        # TODO(synk): residual lane pad (<128 elems per channel) still makes one
        # copy of the inputs; only taken when the flat length is not 128-aligned.
        cfg = [(0, 0), (0, 0), (0, pad)]
        pred_f = jnp.pad(pred_f, cfg)
        target_f = jnp.pad(target_f, cfg)

    pred_f = pred_f.reshape(N, chans, rows, 128)
    target_f = target_f.reshape(N, chans, rows, 128)

    # Tile sizing: ~block_bytes per input block, sublane-aligned.
    cap_rows = max(8, (block_bytes // (chans * 128 * itemsize)) // 8 * 8)
    tile_rows = min(cap_rows, _round_up(rows, 8))
    if tile_rows > rows:
        tile_rows = rows          # single chunk; block covers the full rows dim
    num_chunks = -(-rows // tile_rows)
    mask_rows = (rows % tile_rows) != 0   # only the last chunk can be ragged

    kernel = functools.partial(
        _sse_toy_kernel if toY else _sse_kernel,
        valid_rows=rows, tile_rows=tile_rows, mask_rows=mask_rows)

    block = (1, chans, tile_rows, 128)
    imap = lambda n, c: (n, 0, c, 0)

    sse_blocks = pl.pallas_call(
        kernel,
        out_shape=jax.ShapeDtypeStruct((N, 8, 128), jnp.float32),
        grid=(N, num_chunks),
        in_specs=[
            pl.BlockSpec(block, imap),
            pl.BlockSpec(block, imap),
        ],
        out_specs=pl.BlockSpec((1, 8, 128), lambda n, c: (n, 0, 0)),
        scratch_shapes=[pltpu.VMEM((8, 128), jnp.float32)],
        compiler_params=pltpu.CompilerParams(
            dimension_semantics=("parallel", "arbitrary"),
            vmem_limit_bytes=_VMEM_LIMIT_BYTES,
        ),
    )(pred_f, target_f)

    # Trivial JAX epilogue over N tiny blocks: per-sample SSE -> mse -> log -> mean.
    sse = jnp.sum(sse_blocks, axis=(1, 2))
    mse = sse / count + _EPS
    return loss_weight * _SCALE * jnp.mean(jnp.log(mse))


def _reference(pred, target, loss_weight=1.0, toY=False):
    pred = pred.astype(jnp.float32)
    target = target.astype(jnp.float32)
    if toY:
        coef = jnp.asarray(_Y_COEF, jnp.float32).reshape(1, 3, 1, 1)
        pred = ((pred * coef).sum(axis=1, keepdims=True) + 16.0) / 255.0
        target = ((target * coef).sum(axis=1, keepdims=True) + 16.0) / 255.0
    mse = jnp.mean((pred - target) ** 2, axis=(1, 2, 3)) + _EPS
    return loss_weight * _SCALE * jnp.mean(jnp.log(mse))


if __name__ == "__main__":
    key = jax.random.PRNGKey(0)
    k1, k2, k3, k4, k5, k6 = jax.random.split(key, 6)

    # Case 1: plain path, 128-aligned flat size (no pad at all), (2, 4, 16, 16).
    pred = jax.random.uniform(k1, (2, 4, 16, 16), jnp.float32)
    target = jax.random.uniform(k2, (2, 4, 16, 16), jnp.float32)
    out = jax.block_until_ready(psnr_loss(pred, target, loss_weight=1.0, toY=False))
    ref = _reference(pred, target, loss_weight=1.0, toY=False)
    assert jnp.allclose(out, ref, rtol=1e-4, atol=1e-4), (out, ref)

    # Case 2: fused toY path with non-128-aligned spatial size (residual lane pad).
    pred_y = jax.random.uniform(k3, (2, 3, 10, 10), jnp.float32)
    target_y = jax.random.uniform(k4, (2, 3, 10, 10), jnp.float32)
    out_y = jax.block_until_ready(psnr_loss(pred_y, target_y, loss_weight=0.5, toY=True))
    ref_y = _reference(pred_y, target_y, loss_weight=0.5, toY=True)
    assert jnp.allclose(out_y, ref_y, rtol=1e-4, atol=1e-4), (out_y, ref_y)

    # Case 3: multi-chunk reduction with a ragged (masked) last chunk,
    # forced by a tiny per-block byte budget.
    pred_m = jax.random.uniform(k5, (2, 4, 24, 32), jnp.float32)   # rows = 24, tile_rows = 16
    target_m = jax.random.uniform(k6, (2, 4, 24, 32), jnp.float32)
    out_m = jax.block_until_ready(
        psnr_loss(pred_m, target_m, loss_weight=1.0, toY=False, block_bytes=8192))
    ref_m = _reference(pred_m, target_m, loss_weight=1.0, toY=False)
    assert jnp.allclose(out_m, ref_m, rtol=1e-4, atol=1e-4), (out_m, ref_m)

    print("KERNEL_OK")
</pallas_src>

<mosaic_0001>
module attributes {stable_mosaic.version = 11 : i64} {
  func.func @_sse_kernel(%arg0: i32, %arg1: i32, %arg2: memref<1x1x8x128xf32, #tpu.memory_space<vmem>>, %arg3: memref<1x1x8x128xf32, #tpu.memory_space<vmem>>, %arg4: memref<1x8x128xf32, #tpu.memory_space<vmem>>, %arg5: memref<8x128xf32, #tpu.memory_space<vmem>>) attributes {dimension_semantics = [#tpu.dimension_semantics<parallel>, #tpu.dimension_semantics<arbitrary>], iteration_bounds = array<i64: 2, 1>, scalar_prefetch = 0 : i64, scratch_operands = 1 : i64, tpu.core_type = #tpu.core_type<tc>, window_params = [{transform_indices = @transform_0, window_bounds = array<i64: 1, 1, 8, 128>}, {transform_indices = @transform_1, window_bounds = array<i64: 1, 1, 8, 128>}, {transform_indices = @transform_2, window_bounds = array<i64: 1, 8, 128>}]} {
    %c0_i32 = arith.constant 0 : i32
    %0 = arith.cmpi eq, %arg1, %c0_i32 : i32
    %1 = arith.extui %0 : i1 to i32
    %c0_i32_0 = arith.constant 0 : i32
    %2 = arith.cmpi ne, %1, %c0_i32_0 : i32
    scf.if %2 {
      %cst_14 = arith.constant 0.000000e+00 : f32
      %17 = vector.broadcast %cst_14 : f32 to vector<8x128xf32>
      %c0_15 = arith.constant 0 : index
      %c0_16 = arith.constant 0 : index
      %18 = vector.load %arg5[%c0_15, %c0_16] : memref<8x128xf32, #tpu.memory_space<vmem>>, vector<8x128xf32>
      tpu.vector_store %arg5[%c0_15, %c0_16], %17 {strides = array<i32>} : memref<8x128xf32, #tpu.memory_space<vmem>>, vector<8x128xf32>,
    } else {
    }
    %c0 = arith.constant 0 : index
    %c0_1 = arith.constant 0 : index
    %c0_2 = arith.constant 0 : index
    %c0_3 = arith.constant 0 : index
    %3 = vector.load %arg2[%c0, %c0_1, %c0_2, %c0_3] : memref<1x1x8x128xf32, #tpu.memory_space<vmem>>, vector<1x1x8x128xf32>
    %4 = vector.shape_cast %3 : vector<1x1x8x128xf32> to vector<8x128xf32>
    %c0_4 = arith.constant 0 : index
    %c0_5 = arith.constant 0 : index
    %c0_6 = arith.constant 0 : index
    %c0_7 = arith.constant 0 : index
    %5 = vector.load %arg3[%c0_4, %c0_5, %c0_6, %c0_7] : memref<1x1x8x128xf32, #tpu.memory_space<vmem>>, vector<1x1x8x128xf32>
    %6 = vector.shape_cast %5 : vector<1x1x8x128xf32> to vector<8x128xf32>
    %7 = arith.subf %4, %6 : vector<8x128xf32>
    %8 = arith.mulf %7, %7 : vector<8x128xf32>
    %c0_8 = arith.constant 0 : index
    %c0_9 = arith.constant 0 : index
    %9 = vector.load %arg5[%c0_8, %c0_9] : memref<8x128xf32, #tpu.memory_space<vmem>>, vector<8x128xf32>
    %10 = vector.shape_cast %8 : vector<8x128xf32> to vector<1x8x128xf32>
    %cst = arith.constant dense<0.000000e+00> : vector<8x128xf32>
    %11 = vector.multi_reduction <add>, %10, %cst [0] : vector<1x8x128xf32> to vector<8x128xf32>
    %12 = arith.addf %9, %11 : vector<8x128xf32>
    %c0_10 = arith.constant 0 : index
    %c0_11 = arith.constant 0 : index
    %13 = vector.load %arg5[%c0_10, %c0_11] : memref<8x128xf32, #tpu.memory_space<vmem>>, vector<8x128xf32>
    tpu.vector_store %arg5[%c0_10, %c0_11], %12 {strides = array<i32>} : memref<8x128xf32, #tpu.memory_space<vmem>>, vector<8x128xf32>,
    %c0_i32_12 = arith.constant 0 : i32
    %14 = arith.cmpi eq, %arg1, %c0_i32_12 : i32
    %15 = arith.extui %14 : i1 to i32
    %c0_i32_13 = arith.constant 0 : i32
    %16 = arith.cmpi ne, %15, %c0_i32_13 : i32
    scf.if %16 {
      %c0_14 = arith.constant 0 : index
      %c0_15 = arith.constant 0 : index
      %17 = vector.load %arg5[%c0_14, %c0_15] : memref<8x128xf32, #tpu.memory_space<vmem>>, vector<8x128xf32>
      %c0_16 = arith.constant 0 : index
      %c0_17 = arith.constant 0 : index
      %c0_18 = arith.constant 0 : index
      %18 = vector.load %arg4[%c0_16, %c0_17, %c0_18] : memref<1x8x128xf32, #tpu.memory_space<vmem>>, vector<1x8x128xf32>
      %19 = vector.shape_cast %18 : vector<1x8x128xf32> to vector<8x128xf32>
      %20 = vector.shape_cast %17 : vector<8x128xf32> to vector<1x8x128xf32>
      tpu.vector_store %arg4[%c0_16, %c0_17, %c0_18], %20 {strides = array<i32>} : memref<1x8x128xf32, #tpu.memory_space<vmem>>, vector<1x8x128xf32>,
    } else {
    }
    return
  }
  func.func @transform_0(%arg0: i32, %arg1: i32) -> (i32, i32, i32, i32) {
    %c0_i32 = arith.constant 0 : i32
    %c0_i32_0 = arith.constant 0 : i32
    %c0_i32_1 = arith.constant 0 : i32
    return %arg0, %c0_i32, %arg1, %c0_i32_0 : i32, i32, i32, i32
  }
  func.func @transform_1(%arg0: i32, %arg1: i32) -> (i32, i32, i32, i32) {
    %c0_i32 = arith.constant 0 : i32
    %c0_i32_0 = arith.constant 0 : i32
    %c0_i32_1 = arith.constant 0 : i32
    return %arg0, %c0_i32, %arg1, %c0_i32_0 : i32, i32, i32, i32
  }
  func.func @transform_2(%arg0: i32, %arg1: i32) -> (i32, i32, i32) {
    %c0_i32 = arith.constant 0 : i32
    %c0_i32_0 = arith.constant 0 : i32
    %c0_i32_1 = arith.constant 0 : i32
    return %arg0, %c0_i32, %c0_i32_0 : i32, i32, i32
  }
}

</mosaic_0001>

<llo_original>
// kernel: tpu_custom_call.1
$region0: #{tpu_custom_call.1}
  #allocation0 [shape = 'u32[]', space=smem, size = 0x4, offset = 0x4, fixed_abs, tag = 'smem constant byte address 0x4 - core index']
  #allocation1 [shape = 'u32[144,128]{1,0:T(1,128)}', space=vmem, size = 0x12000, scoped, tag = 'internal scratch']
  #allocation2 [shape = 'f32[8,128]{1,0:T(8,128)}', space=vmem, size = 0x1000, scoped, tag = 'scratch operand']
  %s0 = inlined_call_operand.hbm [shape: f32[2,1,8,128], index: 0, kind: input, shape index: {}]
  %s1 = inlined_call_operand.hbm [shape: f32[2,1,8,128], index: 1, kind: input, shape index: {}]
  %s2 = inlined_call_operand.hbm [shape: f32[2,8,128], index: 2, kind: output, shape index: {}]
  %s3 = sld [smem:[#allocation0]]
  $region57: #{tpu_custom_call.1} parent=0
    _
  %s5 = ssub.s32 1, %s3
  %s6 = scalar_select 0, %s5, %s3
  $region1: #{tpu_custom_call.1} parent=0
    #allocation3 [shape = 'u8[8192]{0}', space=vmem, size = 0x2000, scoped, tag = 'input window, operand 0']
    #allocation4 [shape = 's32[2]{0}', space=sflag, size = 0x8, scoped, tag = 'scoped memory for tpu_custom_call.1']
    #allocation5 [shape = 's32[2]{0}', space=sflag, size = 0x8, scoped, tag = 'scoped memory for tpu_custom_call.1']
    #allocation6 [shape = 'u8[8192]{0}', space=vmem, size = 0x2000, scoped, tag = 'input window, operand 1']
    #allocation7 [shape = 's32[2]{0}', space=sflag, size = 0x8, scoped, tag = 'scoped memory for tpu_custom_call.1']
    #allocation8 [shape = 'u8[8192]{0}', space=vmem, size = 0x2000, scoped, tag = 'output window, operand 0']
    %7 = vsyncpa [#allocation4], 0
    %s8 = scalar_lea.sflag [#allocation4], 1
    %9 = vsyncpa %s8, 0
    %10 = vsyncpa [#allocation7], 0
    %s11 = scalar_lea.sflag [#allocation7], 1
    %12 = vsyncpa %s11, 0
    %13 = vsyncpa [#allocation5], 0
    %s14 = scalar_lea.sflag [#allocation5], 1
    %15 = vsyncpa %s14, 0
    loop: start=0, step=1, limit=4
    $region2: #{tpu_custom_call.1} parent=1 // loop_pre_header
      _
    $region3: #{tpu_custom_call.1} parent=1 // loop_header
      %s17 = sphi 0, %s21
      %p18 = scmp.ge.s32.totalorder %s17, 4
      %s24 = sphi 0, %s36
      %s25 = sphi 0, %s32
      %s26 = sphi 0, %s24
      %s27 = sphi 0, %s25
      %s28 = sphi 0, %s26
      %s29 = sphi 0, %s27
      %s41 = sphi 0, %s43
      %s44 = sphi 0, %s41
      %s45 = sphi 0, %s44
      %s61 = sphi 0, %s45
      %s69 = sphi 0, %s71
      %s72 = sphi 0, %s69
      %s73 = sphi 0, %s72
      %s89 = sphi 0, %s73
      %s95 = sphi 0, %s97
      %s98 = sphi 0, %s95
      %s99 = sphi 0, %s98
      %s115 = sphi 0, %s99
    $region4: #{tpu_custom_call.1} parent=1 // loop_header_branch
      %20 = sbr.rel (%p18) target = $region8
    $region5: #{tpu_custom_call.1} parent=1 // loop_body
      %s22 = ssub.s32 %s17, 1
      %s23 = ssub.s32 %s17, 2
      %s30 = sadd.s32 1, %s25
      %p31 = scmp.ge.s32.totalorder %s30, 1
      %s32 = scalar_select %p31, 0, %s30
      %s33 = sadd.s32 1, %s24
      %s34 = scalar_select %p31, %s33, %s24
      %p35 = scmp.ge.s32.totalorder %s34, 2
      %s36 = scalar_select %p35, 0, %s34
      %s37 = ssub.s32 %s24, %s36
      %s38 = ssub.s32 %s25, %s32
      %s39 = sor.u32 %s37, %s38
      %p40 = scmp.eq.s32.totalorder %s39, 0
      %s42 = sadd.s32 %s41, 1
      %s43 = scalar_select %p40, %s41, %s42
      %p46 = pneg %p40
      %p47 = scmp.eq.s32.totalorder %s17, 1
      %p48 = por %p46, %p47
      %p49 = scmp.ne.s32.totalorder %s41, %s44
      %p50 = scmp.eq.s32.totalorder %s17, 0
      %p51 = por %p49, %p50
      %p52 = scmp.ne.s32.totalorder %s41, %s44
      %p53 = scmp.eq.s32.totalorder %s22, 1
      %p54 = por %p52, %p53
      %p55 = scmp.ne.s32.totalorder %s44, %s45
      %p56 = scmp.eq.s32.totalorder %s22, 0
      %p57 = por %p55, %p56
      %p58 = scmp.ne.s32.totalorder %s44, %s45
      %p59 = scmp.eq.s32.totalorder %s23, 1
      %p60 = por %p58, %p59
      %p62 = scmp.ne.s32.totalorder %s45, %s61
      %p63 = scmp.eq.s32.totalorder %s23, 0
      %p64 = por %p62, %p63
      %s65 = ssub.s32 %s24, %s36
      %s66 = ssub.s32 %s25, %s32
      %s67 = sor.u32 %s65, %s66
      %p68 = scmp.eq.s32.totalorder %s67, 0
      %s70 = sadd.s32 %s69, 1
      %s71 = scalar_select %p68, %s69, %s70
      %p74 = pneg %p68
      %p75 = scmp.eq.s32.totalorder %s17, 1
      %p76 = por %p74, %p75
      %p77 = scmp.ne.s32.totalorder %s69, %s72
      %p78 = scmp.eq.s32.totalorder %s17, 0
      %p79 = por %p77, %p78
      %p80 = scmp.ne.s32.totalorder %s69, %s72
      %p81 = scmp.eq.s32.totalorder %s22, 1
      %p82 = por %p80, %p81
      %p83 = scmp.ne.s32.totalorder %s72, %s73
      %p84 = scmp.eq.s32.totalorder %s22, 0
      %p85 = por %p83, %p84
      %p86 = scmp.ne.s32.totalorder %s72, %s73
      %p87 = scmp.eq.s32.totalorder %s23, 1
      %p88 = por %p86, %p87
      %p90 = scmp.ne.s32.totalorder %s73, %s89
      %p91 = scmp.eq.s32.totalorder %s23, 0
      %p92 = por %p90, %p91
      %s93 = ssub.s32 %s24, %s36
      %p94 = scmp.eq.s32.totalorder %s93, 0
      %s96 = sadd.s32 %s95, 1
      %s97 = scalar_select %p94, %s95, %s96
      %p100 = pneg %p94
      %p101 = scmp.eq.s32.totalorder %s17, 1
      %p102 = por %p100, %p101
      %p103 = scmp.ne.s32.totalorder %s95, %s98
      %p104 = scmp.eq.s32.totalorder %s17, 0
      %p105 = por %p103, %p104
      %p106 = scmp.ne.s32.totalorder %s95, %s98
      %p107 = scmp.eq.s32.totalorder %s22, 1
      %p108 = por %p106, %p107
      %p109 = scmp.ne.s32.totalorder %s98, %s99
      %p110 = scmp.eq.s32.totalorder %s22, 0
      %p111 = por %p109, %p110
      %p112 = scmp.ne.s32.totalorder %s98, %s99
      %p113 = scmp.eq.s32.totalorder %s23, 1
      %p114 = por %p112, %p113
      %p116 = scmp.ne.s32.totalorder %s99, %s115
      %p117 = scmp.eq.s32.totalorder %s23, 0
      %p118 = por %p116, %p117
      %p119 = scmp.le.s32.totalorder 1, %s17
      %p120 = scmp.lt.s32.totalorder %s17, 3
      %p121 = pnand %p119, %p120
      %p122 = pneg %p121
      // Predicated region
      $region9: #{tpu_custom_call.1} parent=5 // pred_check
        _
      $region10: #{tpu_custom_call.1} parent=5 // pred_check_branch
        %124 = sbr.rel (%p121) target = $region12
      $region11: #{tpu_custom_call.1} parent=5 // pred_region
        %s125 = ssub.s32 %s17, 1
      $region12: #{tpu_custom_call.1} parent=5 // pred_fallthru
        _
      %p126 = scmp.lt.s32.totalorder %s17, 2
      // Predicated region
      $region13: #{tpu_custom_call.1} parent=5 // pred_check
        %p127 = pneg %p126
      $region14: #{tpu_custom_call.1} parent=5 // pred_check_branch
        %129 = sbr.rel (%p127) target = $region16
      $region15: #{tpu_custom_call.1} parent=5 // pred_region
        // Predicated region
        $region17: #{tpu_custom_call.1} parent=15 // pred_check
          %p130 = pneg %p51
        $region18: #{tpu_custom_call.1} parent=15 // pred_check_branch
          %132 = sbr.rel (%p130) target = $region20
        $region19: #{tpu_custom_call.1} parent=15 // pred_region
          %s133 = sand.u32 %s41, 1
          %s134 = scalar_lea.sflag [#allocation4], %s133
          %s135 = sand.u32 %s41, 1
          %s136 = smul.addr %s135, 8
          %s137 = scalar_lea.vmem [#allocation3], %s136
          %s139 = ssub.s32 128, 128
          %140 = vsyncadd %s134, %s139
          %s141 = sadd.s32 %s25, %s24
          %s142 = smul.addr %s141, 128
          %s143 = scalar_lea.hbm %s0, %s142
          %s145 = sshll.u32 %s137, 4
          %s146 = int_to_ptr.vmem [resolvable:$true] %s145
          %148 = dma.hbm_to_vmem [thread:$0]  %s143, 128, %s146, %s134
        $region20: #{tpu_custom_call.1} parent=15 // pred_fallthru
          _
        // Predicated region
        $region21: #{tpu_custom_call.1} parent=15 // pred_check
          %p149 = pneg %p79
        $region22: #{tpu_custom_call.1} parent=15 // pred_check_branch
          %151 = sbr.rel (%p149) target = $region24
        $region23: #{tpu_custom_call.1} parent=15 // pred_region
          %s152 = sand.u32 %s69, 1
          %s153 = scalar_lea.sflag [#allocation7], %s152
          %s154 = sand.u32 %s69, 1
          %s155 = smul.addr %s154, 8
          %s156 = scalar_lea.vmem [#allocation6], %s155
          %s158 = ssub.s32 128, 128
          %159 = vsyncadd %s153, %s158
          %s160 = sadd.s32 %s25, %s24
          %s161 = smul.addr %s160, 128
          %s162 = scalar_lea.hbm %s1, %s161
          %s164 = sshll.u32 %s156, 4
          %s165 = int_to_ptr.vmem [resolvable:$true] %s164
          %167 = dma.hbm_to_vmem [thread:$0]  %s162, 128, %s165, %s153
        $region24: #{tpu_custom_call.1} parent=15 // pred_fallthru
          _
      $region16: #{tpu_custom_call.1} parent=5 // pred_fallthru
        _
      %p168 = scmp.le.s32.totalorder 1, %s17
      %p169 = scmp.lt.s32.totalorder %s17, 3
      %p170 = pnand %p168, %p169
      %p171 = pneg %p170
      // Predicated region
      $region25: #{tpu_custom_call.1} parent=5 // pred_check
        _
      $region26: #{tpu_custom_call.1} parent=5 // pred_check_branch
        %173 = sbr.rel (%p170) target = $region28
      $region27: #{tpu_custom_call.1} parent=5 // pred_region
        %s174 = ssub.s32 %s17, 1
        %s175 = sand.u32 %s44, 1
        %s176 = scalar_lea.sflag [#allocation4], %s175
        %s177 = sand.u32 %s44, 1
        %s178 = smul.addr %s177, 8
        %s179 = scalar_lea.vmem [#allocation3], %s178
        // Predicated region
        $region29: #{tpu_custom_call.1} parent=27 // pred_check
          %p180 = pneg %p57
        $region30: #{tpu_custom_call.1} parent=27 // pred_check_branch
          %182 = sbr.rel (%p180) target = $region32
        $region31: #{tpu_custom_call.1} parent=27 // pred_region
          %183 = dma.done %s176, 128
        $region32: #{tpu_custom_call.1} parent=27 // pred_fallthru
          _
        %s184 = sand.u32 %s72, 1
        %s185 = scalar_lea.sflag [#allocation7], %s184
        %s186 = sand.u32 %s72, 1
        %s187 = smul.addr %s186, 8
        %s188 = scalar_lea.vmem [#allocation6], %s187
        // Predicated region
        $region33: #{tpu_custom_call.1} parent=27 // pred_check
          %p189 = pneg %p85
        $region34: #{tpu_custom_call.1} parent=27 // pred_check_branch
          %191 = sbr.rel (%p189) target = $region36
        $region35: #{tpu_custom_call.1} parent=27 // pred_region
          %192 = dma.done %s185, 128
        $region36: #{tpu_custom_call.1} parent=27 // pred_fallthru
          _
        %s193 = sand.u32 %s44, 1
        %s194 = scalar_lea.sflag [#allocation4], %s193
        %s195 = sand.u32 %s44, 1
        %s196 = smul.addr %s195, 8
        %s197 = scalar_lea.vmem [#allocation3], %s196
        %p198 = pneg %p57
        %p199 = pneg %p54
        %s200 = sand.u32 %s72, 1
        %s201 = scalar_lea.sflag [#allocation7], %s200
        %s202 = sand.u32 %s72, 1
        %s203 = smul.addr %s202, 8
        %s204 = scalar_lea.vmem [#allocation6], %s203
        %p205 = pneg %p85
        %p206 = pneg %p82
        %p207 = pneg %p111
        %p208 = pneg %p108
        %s209 = sand.u32 %s98, 1
        %s210 = scalar_lea.sflag [#allocation5], %s209
        %s211 = sand.u32 %s98, 1
        %s212 = smul.addr %s211, 8
        %s213 = scalar_lea.vmem [#allocation8], %s212
        %p214 = scmp.eq.s32.totalorder %s27, 0
        // Predicated region
        $region37: #{tpu_custom_call.1} parent=27 // pred_check
          %p215 = pneg %p214
        $region38: #{tpu_custom_call.1} parent=27 // pred_check_branch
          %217 = sbr.rel (%p215) target = $region40
        $region39: #{tpu_custom_call.1} parent=27 // pred_region
          %218 = vst [vmem:[#allocation2] sm:$0xff] 0.0
        $region40: #{tpu_custom_call.1} parent=27 // pred_fallthru
          _
        %v219 = vld [vmem:[%s179] sm:$0xff]
        %v220 = vld [vmem:[%s188] sm:$0xff]
        %v221 = vsub.f32 %v219, %v220
        %v222 = vmul.f32 %v221, %v221
        %v223 = vld [vmem:[#allocation2] sm:$0xff]
        %v224 = vadd.f32 %v222, 0.0
        %v225 = vadd.f32 %v223, %v224
        %226 = vst [vmem:[#allocation2] sm:$0xff] %v225
        // Predicated region
        $region41: #{tpu_custom_call.1} parent=27 // pred_check
          %p227 = pneg %p214
        $region42: #{tpu_custom_call.1} parent=27 // pred_check_branch
          %229 = sbr.rel (%p227) target = $region44
        $region43: #{tpu_custom_call.1} parent=27 // pred_region
          %v230 = vld [vmem:[#allocation2] sm:$0xff]
          %231 = vst [vmem:[%s213] sm:$0xff] %v230
        $region44: #{tpu_custom_call.1} parent=27 // pred_fallthru
          _
        %s232 = sand.u32 %s98, 1
        %s233 = scalar_lea.sflag [#allocation5], %s232
        %s234 = sand.u32 %s98, 1
        %s235 = smul.addr %s234, 8
        %s236 = scalar_lea.vmem [#allocation8], %s235
        // Predicated region
        $region45: #{tpu_custom_call.1} parent=27 // pred_check
          %p237 = pneg %p108
        $region46: #{tpu_custom_call.1} parent=27 // pred_check_branch
          %239 = sbr.rel (%p237) target = $region48
        $region47: #{tpu_custom_call.1} parent=27 // pred_region
          %s241 = ssub.s32 128, 128
          %242 = vsyncadd %s233, %s241
          %s243 = smul.addr %s26, 128
          %s244 = scalar_lea.hbm %s2, %s243
          %s246 = sshll.u32 %s236, 4
          %s247 = int_to_ptr.vmem [resolvable:$true] %s246
          %249 = dma.vmem_to_hbm [thread:$0]  %s247, 128, %s244, %s233
        $region48: #{tpu_custom_call.1} parent=27 // pred_fallthru
          _
      $region28: #{tpu_custom_call.1} parent=5 // pred_fallthru
        _
      %p250 = scmp.le.s32.totalorder 2, %s17
      // Predicated region
      $region49: #{tpu_custom_call.1} parent=5 // pred_check
        %p251 = pneg %p250
      $region50: #{tpu_custom_call.1} parent=5 // pred_check_branch
        %253 = sbr.rel (%p251) target = $region52
      $region51: #{tpu_custom_call.1} parent=5 // pred_region
        %s254 = ssub.s32 %s17, 2
        // Predicated region
        $region53: #{tpu_custom_call.1} parent=51 // pred_check
          %p255 = pneg %p114
        $region54: #{tpu_custom_call.1} parent=51 // pred_check_branch
          %257 = sbr.rel (%p255) target = $region56
        $region55: #{tpu_custom_call.1} parent=51 // pred_region
          %s258 = sand.u32 %s99, 1
          %s259 = scalar_lea.sflag [#allocation5], %s258
          %s260 = sand.u32 %s99, 1
          %s261 = smul.addr %s260, 8
          %s262 = scalar_lea.vmem [#allocation8], %s261
          %263 = dma.done %s259, 128
        $region56: #{tpu_custom_call.1} parent=51 // pred_fallthru
          _
      $region52: #{tpu_custom_call.1} parent=5 // pred_fallthru
        _
    $region6: #{tpu_custom_call.1} parent=1 // loop_footer
      %s21 = sadd.s32 1, %s17
    $region7: #{tpu_custom_call.1} parent=1 // loop_footer_branch
      %16 = sbr.rel target = $region3
    $region8: #{tpu_custom_call.1} parent=1 // loop_exit
      _
    %264 = vsyncpa [#allocation4], 1
    %s265 = scalar_lea.sflag [#allocation4], 1
    %266 = vsyncpa %s265, 1
    %267 = vsyncpa [#allocation7], 1
    %s268 = scalar_lea.sflag [#allocation7], 1
    %269 = vsyncpa %s268, 1
    %270 = vsyncpa [#allocation5], 1
    %s271 = scalar_lea.sflag [#allocation5], 1
    %272 = vsyncpa %s271, 1

</llo_original>
